<compile_context>
chip_gen: v6e
topology: v6e:2x2x1
jax: 0.10.0
libtpu: 0.0.40
codegen_flags: <defaults>
</compile_context>

<pallas_src>
import functools

import jax
import jax.numpy as jnp
from jax.experimental import pallas as pl
from jax.experimental.pallas import tpu as pltpu


def _round_up(x, m):
    return ((x + m - 1) // m) * m


# ---------------------------------------------------------------------------
# Kernels
# ---------------------------------------------------------------------------

def _maxout_kernel(x_ref, w_ref, b_ref, o_ref, *, k, tn):
    """Single-IN-tile path.

    x_ref: (tm, IN)
    w_ref: (1, IN, k*tn)   packed per-output-tile weights (piece-major lanes)
    b_ref: (1, 1, k*tn)
    o_ref: (tm, tn)

    K lane-aligned sub-dots with incremental max: the live f32 working set is
    ~2 (tm, tn) tiles instead of one wide (tm, k*tn) intermediate.
    """
    x = x_ref[...]
    res = None
    for kk in range(k):
        wk = w_ref[0, :, kk * tn:(kk + 1) * tn]                      # (IN, tn)
        bk = b_ref[0, :, kk * tn:(kk + 1) * tn].astype(jnp.float32)  # (1, tn)
        yk = jnp.dot(x, wk, preferred_element_type=jnp.float32) + bk
        res = yk if res is None else jnp.maximum(res, yk)
    o_ref[...] = res.astype(o_ref.dtype)


def _maxout_kernel_tiled_in(x_ref, w_ref, b_ref, o_ref, acc_ref, *, k, tn):
    """IN-tiled path for large contractions (P3 accumulator pattern).

    grid = (n_tiles, m_tiles, in_tiles); innermost axis is the IN contraction
    ('arbitrary').  Bias + maxout + store run only on the last step.
    """
    c = pl.program_id(2)

    @pl.when(c == 0)
    def _():
        acc_ref[...] = jnp.zeros_like(acc_ref)

    x = x_ref[...]
    for kk in range(k):
        acc_ref[:, kk * tn:(kk + 1) * tn] += jnp.dot(
            x, w_ref[0, :, kk * tn:(kk + 1) * tn],
            preferred_element_type=jnp.float32)

    @pl.when(c == pl.num_programs(2) - 1)
    def _():
        res = None
        for kk in range(k):
            yk = (acc_ref[:, kk * tn:(kk + 1) * tn]
                  + b_ref[0, :, kk * tn:(kk + 1) * tn].astype(jnp.float32))
            res = yk if res is None else jnp.maximum(res, yk)
        o_ref[...] = res.astype(o_ref.dtype)


# ---------------------------------------------------------------------------
# One-time parameter re-layout (hoisted out of the forward pass)
# ---------------------------------------------------------------------------

def prepare_maxout_params(w, b, *, tn_target=128,
                          weight_tile_budget_bytes=16 * 1024 * 1024):
    """Pack (K, IN, OUT) weights into (n_tiles, IN_padded, K*tn) once.

    Columns [kk*tn:(kk+1)*tn] of output tile j hold piece kk's columns for
    that tile, so the kernel's per-piece slices are static and lane-dense.
    The contraction (IN) is tiled only if the double-buffered packed weight
    block would exceed `weight_tile_budget_bytes` (keeps v7x's 64 MiB VMEM
    safe for very wide layers).
    """
    K, IN, OUT = w.shape
    assert b.shape == (K, OUT)

    tn = min(_round_up(tn_target, 128), _round_up(OUT, 128))
    out_p = _round_up(OUT, tn)
    n_tiles = out_p // tn
    wide = K * tn
    w_itemsize = jnp.dtype(w.dtype).itemsize

    if 2 * IN * wide * w_itemsize <= weight_tile_budget_bytes:
        tin = IN                      # single contraction tile, no IN padding
        in_p = IN
    else:
        tin = max(128, (weight_tile_budget_bytes
                        // (2 * wide * w_itemsize)) // 128 * 128)
        in_p = _round_up(IN, tin)
    in_tiles = in_p // tin

    w_p = w
    if out_p != OUT or in_p != IN:
        w_p = jnp.pad(w, ((0, 0), (0, in_p - IN), (0, out_p - OUT)))
    b_p = b if out_p == OUT else jnp.pad(b, ((0, 0), (0, out_p - OUT)))

    w_arr = (w_p.reshape(K, in_p, n_tiles, tn)
                 .transpose(2, 1, 0, 3)
                 .reshape(n_tiles, in_p, wide))
    b_arr = (b_p.reshape(K, n_tiles, tn)
                 .transpose(1, 0, 2)
                 .reshape(n_tiles, 1, wide))

    return dict(w_arr=w_arr, b_arr=b_arr, k=K, input_size=IN, output_size=OUT,
                tn=tn, n_tiles=n_tiles, in_padded=in_p, tin=tin,
                in_tiles=in_tiles)


# ---------------------------------------------------------------------------
# Forward pass
# ---------------------------------------------------------------------------

def maxout_forward(x, params, *, tm_target=128):
    """x: (B, IN) -> (B, OUT) using the packed params from prepare_maxout_params.

    tm_target: 128 is MXU-matched on v5e; use 256 on v6e/v7x for batches >= 256.
    """
    w_arr, b_arr = params["w_arr"], params["b_arr"]
    K, IN, OUT = params["k"], params["input_size"], params["output_size"]
    tn, n_tiles = params["tn"], params["n_tiles"]
    in_p, tin, in_tiles = params["in_padded"], params["tin"], params["in_tiles"]
    wide = K * tn
    out_p = n_tiles * tn

    B, IN_x = x.shape
    assert IN_x == IN

    tm = min(_round_up(tm_target, 8), _round_up(B, 8))
    b_p = _round_up(B, tm)
    m_tiles = b_p // tm

    x_p = x
    if b_p != B or in_p != IN:
        x_p = jnp.pad(x, ((0, b_p - B), (0, in_p - IN)))

    # Double-buffered working set -> scoped VMEM limit (with 2x headroom),
    # clamped to stay below every generation's physical VMEM.
    x_by = jnp.dtype(x_p.dtype).itemsize
    w_by = jnp.dtype(w_arr.dtype).itemsize
    o_by = jnp.dtype(x.dtype).itemsize
    working = 2 * (tm * tin * x_by + tin * wide * w_by + wide * w_by
                   + tm * tn * o_by)

    if in_tiles == 1:
        kernel = functools.partial(_maxout_kernel, k=K, tn=tn)
        # Outer axis = output tile j  ->  each packed weight tile is DMA'd
        # from HBM exactly once; the small x tile is the re-streamed operand.
        grid = (n_tiles, m_tiles)
        in_specs = [
            pl.BlockSpec((tm, in_p), lambda j, i: (i, 0)),
            pl.BlockSpec((1, in_p, wide), lambda j, i: (j, 0, 0)),
            pl.BlockSpec((1, 1, wide), lambda j, i: (j, 0, 0)),
        ]
        out_specs = pl.BlockSpec((tm, tn), lambda j, i: (i, j))
        scratch_shapes = []
        semantics = ("parallel", "parallel")
    else:
        kernel = functools.partial(_maxout_kernel_tiled_in, k=K, tn=tn)
        grid = (n_tiles, m_tiles, in_tiles)
        in_specs = [
            pl.BlockSpec((tm, tin), lambda j, i, c: (i, c)),
            pl.BlockSpec((1, tin, wide), lambda j, i, c: (j, c, 0)),
            pl.BlockSpec((1, 1, wide), lambda j, i, c: (j, 0, 0)),
        ]
        out_specs = pl.BlockSpec((tm, tn), lambda j, i, c: (i, j))
        scratch_shapes = [pltpu.VMEM((tm, wide), jnp.float32)]
        semantics = ("parallel", "parallel", "arbitrary")
        working += tm * wide * 4

    vmem_limit = int(min(48 * 1024 * 1024, max(2 * working, 16 * 1024 * 1024)))

    out_padded = pl.pallas_call(
        kernel,
        out_shape=jax.ShapeDtypeStruct((b_p, out_p), x.dtype),
        grid_spec=pltpu.PrefetchScalarGridSpec(
            num_scalar_prefetch=0,
            grid=grid,
            in_specs=in_specs,
            out_specs=out_specs,
            scratch_shapes=scratch_shapes,
        ),
        compiler_params=pltpu.CompilerParams(
            dimension_semantics=semantics,
            vmem_limit_bytes=vmem_limit,
        ),
    )(x_p, w_arr, b_arr)

    return out_padded[:B, :OUT]


def maxout_reference(x, w, b):
    # Pure-JAX reference mirroring the PyTorch module.
    ys = jnp.einsum("bi,kio->kbo", x, w) + b[:, None, :]
    return jnp.max(ys, axis=0)


if __name__ == "__main__":
    # Small shapes consistent with the module: batch=8, input_size=32,
    # output_size=64, k=4 maxout pieces.  (Correctness check only; at these
    # sizes pallas_call launch/DMA overhead dominates.)
    K, IN, OUT, B = 4, 32, 64, 8

    key = jax.random.PRNGKey(0)
    kx, kw, kb = jax.random.split(key, 3)

    bound = 1.0 / (IN ** 0.5)
    w = jax.random.uniform(kw, (K, IN, OUT), jnp.float32, -bound, bound)
    b = jax.random.uniform(kb, (K, OUT), jnp.float32, -bound, bound)
    x = jax.random.normal(kx, (B, IN), jnp.float32)

    # One-time packing at parameter-init time (hoisted out of the forward).
    params = prepare_maxout_params(w, b)

    out = maxout_forward(x, params)
    out = jax.block_until_ready(out)

    ref = maxout_reference(x, w, b)
    assert out.shape == (B, OUT), out.shape
    assert jnp.allclose(out, ref, atol=1e-5, rtol=1e-5), "mismatch vs reference"

    print("KERNEL_OK")
</pallas_src>

<mosaic_0001>
module attributes {stable_mosaic.version = 11 : i64} {
  func.func @_maxout_kernel(%arg0: i32, %arg1: i32, %arg2: memref<8x32xf32, #tpu.memory_space<vmem>>, %arg3: memref<1x32x512xf32, #tpu.memory_space<vmem>>, %arg4: memref<1x1x512xf32, #tpu.memory_space<vmem>>, %arg5: memref<8x128xf32, #tpu.memory_space<vmem>>) attributes {dimension_semantics = [#tpu.dimension_semantics<parallel>, #tpu.dimension_semantics<parallel>], iteration_bounds = array<i64: 1, 1>, scalar_prefetch = 0 : i64, scratch_operands = 0 : i64, tpu.core_type = #tpu.core_type<tc>, window_params = [{transform_indices = @transform_0, window_bounds = array<i64: 8, 32>}, {transform_indices = @transform_1, window_bounds = array<i64: 1, 32, 512>}, {transform_indices = @transform_2, window_bounds = array<i64: 1, 1, 512>}, {transform_indices = @transform_3, window_bounds = array<i64: 8, 128>}]} {
    %c0 = arith.constant 0 : index
    %c0_0 = arith.constant 0 : index
    %0 = vector.load %arg2[%c0, %c0_0] : memref<8x32xf32, #tpu.memory_space<vmem>>, vector<8x32xf32>
    %c0_1 = arith.constant 0 : index
    %c0_2 = arith.constant 0 : index
    %c0_3 = arith.constant 0 : index
    %1 = vector.load %arg3[%c0_1, %c0_2, %c0_3] : memref<1x32x512xf32, #tpu.memory_space<vmem>>, vector<1x32x128xf32>
    %2 = vector.shape_cast %1 : vector<1x32x128xf32> to vector<32x128xf32>
    %c0_4 = arith.constant 0 : index
    %c0_5 = arith.constant 0 : index
    %c0_6 = arith.constant 0 : index
    %3 = vector.load %arg4[%c0_4, %c0_5, %c0_6] : memref<1x1x512xf32, #tpu.memory_space<vmem>>, vector<1x1x128xf32>
    %4 = vector.shape_cast %3 : vector<1x1x128xf32> to vector<1x128xf32>
    %cst = arith.constant dense<0.000000e+00> : vector<8x128xf32>
    %5 = tpu.matmul %0, %2, %cst {dimension_numbers = #tpu.dot_dimension_numbers<[1], [0], [0], [1], [0, 0, 1, 1], [], []>} : vector<8x32xf32>, vector<32x128xf32>, vector<8x128xf32> -> vector<8x128xf32>
    %6 = vector.broadcast %4 : vector<1x128xf32> to vector<8x128xf32>
    %7 = arith.addf %5, %6 : vector<8x128xf32>
    %c0_7 = arith.constant 0 : index
    %c0_8 = arith.constant 0 : index
    %c128 = arith.constant 128 : index
    %8 = vector.load %arg3[%c0_7, %c0_8, %c128] : memref<1x32x512xf32, #tpu.memory_space<vmem>>, vector<1x32x128xf32>
    %9 = vector.shape_cast %8 : vector<1x32x128xf32> to vector<32x128xf32>
    %c0_9 = arith.constant 0 : index
    %c0_10 = arith.constant 0 : index
    %c128_11 = arith.constant 128 : index
    %10 = vector.load %arg4[%c0_9, %c0_10, %c128_11] : memref<1x1x512xf32, #tpu.memory_space<vmem>>, vector<1x1x128xf32>
    %11 = vector.shape_cast %10 : vector<1x1x128xf32> to vector<1x128xf32>
    %cst_12 = arith.constant dense<0.000000e+00> : vector<8x128xf32>
    %12 = tpu.matmul %0, %9, %cst_12 {dimension_numbers = #tpu.dot_dimension_numbers<[1], [0], [0], [1], [0, 0, 1, 1], [], []>} : vector<8x32xf32>, vector<32x128xf32>, vector<8x128xf32> -> vector<8x128xf32>
    %13 = vector.broadcast %11 : vector<1x128xf32> to vector<8x128xf32>
    %14 = arith.addf %12, %13 : vector<8x128xf32>
    %15 = arith.maximumf %7, %14 : vector<8x128xf32>
    %c0_13 = arith.constant 0 : index
    %c0_14 = arith.constant 0 : index
    %c256 = arith.constant 256 : index
    %16 = vector.load %arg3[%c0_13, %c0_14, %c256] : memref<1x32x512xf32, #tpu.memory_space<vmem>>, vector<1x32x128xf32>
    %17 = vector.shape_cast %16 : vector<1x32x128xf32> to vector<32x128xf32>
    %c0_15 = arith.constant 0 : index
    %c0_16 = arith.constant 0 : index
    %c256_17 = arith.constant 256 : index
    %18 = vector.load %arg4[%c0_15, %c0_16, %c256_17] : memref<1x1x512xf32, #tpu.memory_space<vmem>>, vector<1x1x128xf32>
    %19 = vector.shape_cast %18 : vector<1x1x128xf32> to vector<1x128xf32>
    %cst_18 = arith.constant dense<0.000000e+00> : vector<8x128xf32>
    %20 = tpu.matmul %0, %17, %cst_18 {dimension_numbers = #tpu.dot_dimension_numbers<[1], [0], [0], [1], [0, 0, 1, 1], [], []>} : vector<8x32xf32>, vector<32x128xf32>, vector<8x128xf32> -> vector<8x128xf32>
    %21 = vector.broadcast %19 : vector<1x128xf32> to vector<8x128xf32>
    %22 = arith.addf %20, %21 : vector<8x128xf32>
    %23 = arith.maximumf %15, %22 : vector<8x128xf32>
    %c0_19 = arith.constant 0 : index
    %c0_20 = arith.constant 0 : index
    %c384 = arith.constant 384 : index
    %24 = vector.load %arg3[%c0_19, %c0_20, %c384] : memref<1x32x512xf32, #tpu.memory_space<vmem>>, vector<1x32x128xf32>
    %25 = vector.shape_cast %24 : vector<1x32x128xf32> to vector<32x128xf32>
    %c0_21 = arith.constant 0 : index
    %c0_22 = arith.constant 0 : index
    %c384_23 = arith.constant 384 : index
    %26 = vector.load %arg4[%c0_21, %c0_22, %c384_23] : memref<1x1x512xf32, #tpu.memory_space<vmem>>, vector<1x1x128xf32>
    %27 = vector.shape_cast %26 : vector<1x1x128xf32> to vector<1x128xf32>
    %cst_24 = arith.constant dense<0.000000e+00> : vector<8x128xf32>
    %28 = tpu.matmul %0, %25, %cst_24 {dimension_numbers = #tpu.dot_dimension_numbers<[1], [0], [0], [1], [0, 0, 1, 1], [], []>} : vector<8x32xf32>, vector<32x128xf32>, vector<8x128xf32> -> vector<8x128xf32>
    %29 = vector.broadcast %27 : vector<1x128xf32> to vector<8x128xf32>
    %30 = arith.addf %28, %29 : vector<8x128xf32>
    %31 = arith.maximumf %23, %30 : vector<8x128xf32>
    %c0_25 = arith.constant 0 : index
    %c0_26 = arith.constant 0 : index
    %32 = vector.load %arg5[%c0_25, %c0_26] : memref<8x128xf32, #tpu.memory_space<vmem>>, vector<8x128xf32>
    tpu.vector_store %arg5[%c0_25, %c0_26], %31 {strides = array<i32>} : memref<8x128xf32, #tpu.memory_space<vmem>>, vector<8x128xf32>,
    return
  }
  func.func @transform_0(%arg0: i32, %arg1: i32) -> (i32, i32) {
    %c0_i32 = arith.constant 0 : i32
    %c0_i32_0 = arith.constant 0 : i32
    return %arg1, %c0_i32 : i32, i32
  }
  func.func @transform_1(%arg0: i32, %arg1: i32) -> (i32, i32, i32) {
    %c0_i32 = arith.constant 0 : i32
    %c0_i32_0 = arith.constant 0 : i32
    %c0_i32_1 = arith.constant 0 : i32
    return %arg0, %c0_i32, %c0_i32_0 : i32, i32, i32
  }
  func.func @transform_2(%arg0: i32, %arg1: i32) -> (i32, i32, i32) {
    %c0_i32 = arith.constant 0 : i32
    %c0_i32_0 = arith.constant 0 : i32
    %c0_i32_1 = arith.constant 0 : i32
    return %arg0, %c0_i32, %c0_i32_0 : i32, i32, i32
  }
  func.func @transform_3(%arg0: i32, %arg1: i32) -> (i32, i32) {
    %c0_i32 = arith.constant 0 : i32
    return %arg1, %arg0 : i32, i32
  }
}

</mosaic_0001>

<llo_original>
// kernel: tpu_custom_call.1
$region0: #{tpu_custom_call.1}
  #allocation0 [shape = 'u32[]', space=smem, size = 0x4, offset = 0x4, fixed_abs, tag = 'smem constant byte address 0x4 - core index']
  #allocation1 [shape = 'u32[144,128]{1,0:T(1,128)}', space=vmem, size = 0x12000, scoped, tag = 'internal scratch']
  %s0 = inlined_call_operand.hbm [shape: f32[8,32], index: 0, kind: input, shape index: {}]
  %s1 = inlined_call_operand.hbm [shape: f32[1,32,512], index: 1, kind: input, shape index: {}]
  %s2 = inlined_call_operand.hbm [shape: f32[1,1,512], index: 2, kind: input, shape index: {}]
  %s3 = inlined_call_operand.hbm [shape: f32[8,128], index: 3, kind: output, shape index: {}]
  %s4 = sld [smem:[#allocation0]]
  $region34: #{tpu_custom_call.1} parent=0
    _
  %s6 = ssub.s32 1, %s4
  %s7 = scalar_select 0, %s6, %s4
  $region1: #{tpu_custom_call.1} parent=0
    #allocation2 [shape = 'u8[4096]{0}', space=vmem, size = 0x1000, scoped, tag = 'input window, operand 0, single buffered']
    #allocation3 [shape = 's32[1]{0}', space=sflag, size = 0x4, scoped, tag = 'scoped memory for tpu_custom_call.1']
    #allocation4 [shape = 's32[1]{0}', space=sflag, size = 0x4, scoped, tag = 'scoped memory for tpu_custom_call.1']
    #allocation5 [shape = 'u8[65536]{0}', space=vmem, size = 0x10000, scoped, tag = 'input window, operand 1, single buffered']
    #allocation6 [shape = 's32[1]{0}', space=sflag, size = 0x4, scoped, tag = 'scoped memory for tpu_custom_call.1']
    #allocation7 [shape = 'u8[2048]{0}', space=vmem, size = 0x800, scoped, tag = 'input window, operand 2, single buffered']
    #allocation8 [shape = 'u8[4096]{0}', space=vmem, size = 0x1000, scoped, tag = 'output window, operand 0, single buffered']
    %8 = vsyncpa [#allocation3], 0
    %9 = vsyncpa [#allocation6], 0
    %10 = vsyncpa [#allocation4], 0
    // Predicated region
    $region2: #{tpu_custom_call.1} parent=1 // pred_check
      _
    $region3: #{tpu_custom_call.1} parent=1 // pred_check_branch
      %12 = sbr.rel (0) target = $region5
    $region4: #{tpu_custom_call.1} parent=1 // pred_region
      %s14 = ssub.s32 128, 128
      %15 = vsyncadd [#allocation3], %s14
      %s17 = sshll.u32 [#allocation2], 4
      %s18 = int_to_ptr.vmem [resolvable:$true] %s17
      %20 = dma.hbm_to_vmem [thread:$0]  %s0, 128, %s18, [#allocation3]
    $region5: #{tpu_custom_call.1} parent=1 // pred_fallthru
      _
    // Predicated region
    $region6: #{tpu_custom_call.1} parent=1 // pred_check
      _
    $region7: #{tpu_custom_call.1} parent=1 // pred_check_branch
      %22 = sbr.rel (0) target = $region9
    $region8: #{tpu_custom_call.1} parent=1 // pred_region
      %s24 = ssub.s32 2048, 2048
      %25 = vsyncadd [#allocation6], %s24
      %s26 = sshll.u32 [#allocation5], 4
      %s27 = int_to_ptr.vmem [resolvable:$true] %s26
      %32 = dma.hbm_to_vmem [thread:$0]  %s1, 2048, %s27, [#allocation6], 512, 512, 32
    $region9: #{tpu_custom_call.1} parent=1 // pred_fallthru
      _
    // Predicated region
    $region10: #{tpu_custom_call.1} parent=1 // pred_check
      _
    $region11: #{tpu_custom_call.1} parent=1 // pred_check_branch
      %34 = sbr.rel (0) target = $region13
    $region12: #{tpu_custom_call.1} parent=1 // pred_region
      %s36 = ssub.s32 64, 64
      %37 = vsyncadd [#allocation6], %s36
      %s39 = sshll.u32 [#allocation7], 4
      %s40 = int_to_ptr.vmem [resolvable:$true] %s39
      %42 = dma.hbm_to_vmem [thread:$0]  %s2, 64, %s40, [#allocation6]
    $region13: #{tpu_custom_call.1} parent=1 // pred_fallthru
      _
    // Predicated region
    $region14: #{tpu_custom_call.1} parent=1 // pred_check
      _
    $region15: #{tpu_custom_call.1} parent=1 // pred_check_branch
      %44 = sbr.rel (0) target = $region17
    $region16: #{tpu_custom_call.1} parent=1 // pred_region
      %45 = dma.done [#allocation3], 128
    $region17: #{tpu_custom_call.1} parent=1 // pred_fallthru
      _
    // Predicated region
    $region18: #{tpu_custom_call.1} parent=1 // pred_check
      _
    $region19: #{tpu_custom_call.1} parent=1 // pred_check_branch
      %47 = sbr.rel (0) target = $region21
    $region20: #{tpu_custom_call.1} parent=1 // pred_region
      %48 = dma.done [#allocation6], 2048
    $region21: #{tpu_custom_call.1} parent=1 // pred_fallthru
      _
    // Predicated region
    $region22: #{tpu_custom_call.1} parent=1 // pred_check
      _
    $region23: #{tpu_custom_call.1} parent=1 // pred_check_branch
      %50 = sbr.rel (0) target = $region25
    $region24: #{tpu_custom_call.1} parent=1 // pred_region
      %51 = dma.done [#allocation6], 64
    $region25: #{tpu_custom_call.1} parent=1 // pred_fallthru
      _
    %v52 = vld [vmem:[#allocation2] sm:$0xff]
    %v53 = vld [vmem:[#allocation5] sm:$0xff]
    %v54 = vld [vmem:[#allocation5 + $0x20] sm:$0xff]
    %v55 = vld [vmem:[#allocation5 + $0x40] sm:$0xff]
    %v56 = vld [vmem:[#allocation5 + $0x60] sm:$0xff]
    %v57 = vld [vmem:[#allocation7] sm:$0x1]
    %v59 = vlaneseq
    %v60 = vshrl.u32 %v59, 7
    %v61 = vsub.s32 0, %v60
    %v62 = vrot.slane %v57, %v61
    %vm64 = vcmask 261120
    %v66 = vsel %vm64, %v52, 0
    %68 = vmatprep.subr.mxu0 0.0
    %69 = vmatpush1.msra.mxu0 0.0
    %70 = vmatprep.subr.mxu0 0.0
    %71 = vmatpush1.msra.mxu0 0.0
    %72 = vmatprep.subr.mxu0 0.0
    %73 = vmatpush1.msra.mxu0 0.0
    %74 = vmatprep.subr.mxu0 0.0
    %75 = vmatpush1.msra.mxu0 0.0
    %76 = vmatprep.subr.mxu0 0.0
    %77 = vmatpush1.msra.mxu0 0.0
    %78 = vmatprep.subr.mxu0 0.0
    %79 = vmatpush1.msra.mxu0 0.0
    %80 = vmatprep.subr.mxu0 0.0
    %81 = vmatpush1.msra.mxu0 0.0
    %82 = vmatprep.subr.mxu0 0.0
    %83 = vmatpush1.msra.mxu0 0.0
    %84 = vmatprep.subr.mxu0 0.0
    %85 = vmatpush1.msra.mxu0 0.0
    %86 = vmatprep.subr.mxu0 0.0
    %87 = vmatpush1.msra.mxu0 0.0
    %88 = vmatprep.subr.mxu0 0.0
    %89 = vmatpush1.msra.mxu0 0.0
    %90 = vmatprep.subr.mxu0 0.0
    %91 = vmatpush1.msra.mxu0 0.0
    %92 = vmatprep.subr.mxu0 0.0
    %93 = vmatpush1.msra.mxu0 %v56
    %94 = vmatprep.subr.mxu0 0.0
    %95 = vmatpush1.msra.mxu0 %v55
    %96 = vmatprep.subr.mxu0 0.0
    %97 = vmatpush1.msra.mxu0 %v54
    %98 = vmatprep.subr.mxu0 0.0
    %99 = vmatpush1.msra.mxu0 %v53
    %100 = vmatprep.subr.mxu0 0.0
    %101 = vmatpush2.msra.mxu0 0.0
    %102 = vmatprep.subr.mxu0 0.0
    %103 = vmatpush2.msra.mxu0 0.0
    %104 = vmatprep.subr.mxu0 0.0
    %105 = vmatpush2.msra.mxu0 0.0
    %106 = vmatprep.subr.mxu0 0.0
    %107 = vmatpush2.msra.mxu0 0.0
    %108 = vmatprep.subr.mxu0 0.0
    %109 = vmatpush2.msra.mxu0 0.0
    %110 = vmatprep.subr.mxu0 0.0
    %111 = vmatpush2.msra.mxu0 0.0
    %112 = vmatprep.subr.mxu0 0.0
    %113 = vmatpush2.msra.mxu0 0.0
    %114 = vmatprep.subr.mxu0 0.0
    %115 = vmatpush2.msra.mxu0 0.0
    %116 = vmatprep.subr.mxu0 0.0
    %117 = vmatpush2.msra.mxu0 0.0
    %118 = vmatprep.subr.mxu0 0.0
    %119 = vmatpush2.msra.mxu0 0.0
    %120 = vmatprep.subr.mxu0 0.0
    %121 = vmatpush2.msra.mxu0 0.0
    %122 = vmatprep.subr.mxu0 0.0
    %123 = vmatpush2.msra.mxu0 0.0
    %124 = vmatprep.subr.mxu0 0.0
    %125 = vmatpush2.msra.mxu0 0.0
    %126 = vmatprep.subr.mxu0 0.0
    %127 = vmatpush2.msra.mxu0 0.0
    %128 = vmatprep.subr.mxu0 0.0
    %129 = vmatpush2.msra.mxu0 0.0
    %130 = vmatprep.subr.mxu0 0.0
    %131 = vmatpush2.msra.mxu0 0.0
    %132 = vmatprep.mubr.f32.mxu0 0.0
    %133 = vmatmul.mubr.f32.gmra.mxu0 %v66
    %v134 = vpop.f32.mrf.mxu0
    %v135 = vadd.f32 %v62, %v134
    %v136 = vpop.f32.mrf.mxu0
    %137 = vdwg.mxu0
    %v138 = vld [vmem:[#allocation5 + $0x8] sm:$0xff]
    %v139 = vld [vmem:[#allocation5 + $0x28] sm:$0xff]
    %v140 = vld [vmem:[#allocation5 + $0x48] sm:$0xff]
    %v141 = vld [vmem:[#allocation5 + $0x68] sm:$0xff]
    %v142 = vld [vmem:[#allocation7 + $0x1] sm:$0x1]
    %v144 = vlaneseq
    %v145 = vshrl.u32 %v144, 7
    %v146 = vsub.s32 0, %v145
    %v147 = vrot.slane %v142, %v146
    %149 = vmatprep.subr.mxu0 0.0
    %150 = vmatpush1.msra.mxu0 0.0
    %151 = vmatprep.subr.mxu0 0.0
    %152 = vmatpush1.msra.mxu0 0.0
    %153 = vmatprep.subr.mxu0 0.0
    %154 = vmatpush1.msra.mxu0 0.0
    %155 = vmatprep.subr.mxu0 0.0
    %156 = vmatpush1.msra.mxu0 0.0
    %157 = vmatprep.subr.mxu0 0.0
    %158 = vmatpush1.msra.mxu0 0.0
    %159 = vmatprep.subr.mxu0 0.0
    %160 = vmatpush1.msra.mxu0 0.0
    %161 = vmatprep.subr.mxu0 0.0
    %162 = vmatpush1.msra.mxu0 0.0
    %163 = vmatprep.subr.mxu0 0.0
    %164 = vmatpush1.msra.mxu0 0.0
    %165 = vmatprep.subr.mxu0 0.0
    %166 = vmatpush1.msra.mxu0 0.0
    %167 = vmatprep.subr.mxu0 0.0
    %168 = vmatpush1.msra.mxu0 0.0
    %169 = vmatprep.subr.mxu0 0.0
    %170 = vmatpush1.msra.mxu0 0.0
    %171 = vmatprep.subr.mxu0 0.0
    %172 = vmatpush1.msra.mxu0 0.0
    %173 = vmatprep.subr.mxu0 0.0
    %174 = vmatpush1.msra.mxu0 %v141
    %175 = vmatprep.subr.mxu0 0.0
    %176 = vmatpush1.msra.mxu0 %v140
    %177 = vmatprep.subr.mxu0 0.0
    %178 = vmatpush1.msra.mxu0 %v139
    %179 = vmatprep.subr.mxu0 0.0
    %180 = vmatpush1.msra.mxu0 %v138
    %181 = vmatprep.subr.mxu0 0.0
    %182 = vmatpush2.msra.mxu0 0.0
    %183 = vmatprep.subr.mxu0 0.0
    %184 = vmatpush2.msra.mxu0 0.0
    %185 = vmatprep.subr.mxu0 0.0
    %186 = vmatpush2.msra.mxu0 0.0
    %187 = vmatprep.subr.mxu0 0.0
    %188 = vmatpush2.msra.mxu0 0.0
    %189 = vmatprep.subr.mxu0 0.0
    %190 = vmatpush2.msra.mxu0 0.0
    %191 = vmatprep.subr.mxu0 0.0
    %192 = vmatpush2.msra.mxu0 0.0
    %193 = vmatprep.subr.mxu0 0.0
    %194 = vmatpush2.msra.mxu0 0.0
    %195 = vmatprep.subr.mxu0 0.0
    %196 = vmatpush2.msra.mxu0 0.0
    %197 = vmatprep.subr.mxu0 0.0
    %198 = vmatpush2.msra.mxu0 0.0
    %199 = vmatprep.subr.mxu0 0.0
    %200 = vmatpush2.msra.mxu0 0.0
    %201 = vmatprep.subr.mxu0 0.0
    %202 = vmatpush2.msra.mxu0 0.0
    %203 = vmatprep.subr.mxu0 0.0
    %204 = vmatpush2.msra.mxu0 0.0
    %205 = vmatprep.subr.mxu0 0.0
    %206 = vmatpush2.msra.mxu0 0.0
    %207 = vmatprep.subr.mxu0 0.0
    %208 = vmatpush2.msra.mxu0 0.0
    %209 = vmatprep.subr.mxu0 0.0
    %210 = vmatpush2.msra.mxu0 0.0
    %211 = vmatprep.subr.mxu0 0.0
    %212 = vmatpush2.msra.mxu0 0.0
    %213 = vmatprep.mubr.f32.mxu0 0.0
    %214 = vmatmul.mubr.f32.gmra.mxu0 %v66
    %v215 = vpop.f32.mrf.mxu0
    %v216 = vadd.f32 %v147, %v215
    %v217 = vpop.f32.mrf.mxu0
    %218 = vdwg.mxu0
    %v219 = vmax.f32 %v135, %v216
    %v220 = vld [vmem:[#allocation5 + $0x10] sm:$0xff]
    %v221 = vld [vmem:[#allocation5 + $0x30] sm:$0xff]
    %v222 = vld [vmem:[#allocation5 + $0x50] sm:$0xff]
    %v223 = vld [vmem:[#allocation5 + $0x70] sm:$0xff]
    %v224 = vld [vmem:[#allocation7 + $0x2] sm:$0x1]
    %v226 = vlaneseq
    %v227 = vshrl.u32 %v226, 7
    %v228 = vsub.s32 0, %v227
    %v229 = vrot.slane %v224, %v228
    %231 = vmatprep.subr.mxu0 0.0
    %232 = vmatpush1.msra.mxu0 0.0
    %233 = vmatprep.subr.mxu0 0.0
    %234 = vmatpush1.msra.mxu0 0.0
    %235 = vmatprep.subr.mxu0 0.0
    %236 = vmatpush1.msra.mxu0 0.0
    %237 = vmatprep.subr.mxu0 0.0
    %238 = vmatpush1.msra.mxu0 0.0
    %239 = vmatprep.subr.mxu0 0.0
    %240 = vmatpush1.msra.mxu0 0.0
    %241 = vmatprep.subr.mxu0 0.0
    %242 = vmatpush1.msra.mxu0 0.0
    %243 = vmatprep.subr.mxu0 0.0
    %244 = vmatpush1.msra.mxu0 0.0
    %245 = vmatprep.subr.mxu0 0.0
    %246 = vmatpush1.msra.mxu0 0.0
    %247 = vmatprep.subr.mxu0 0.0
    %248 = vmatpush1.msra.mxu0 0.0
    %249 = vmatprep.subr.mxu0 0.0
    %250 = vmatpush1.msra.mxu0 0.0
    %251 = vmatprep.subr.mxu0 0.0
    %252 = vmatpush1.msra.mxu0 0.0
    %253 = vmatprep.subr.mxu0 0.0
    %254 = vmatpush1.msra.mxu0 0.0
    %255 = vmatprep.subr.mxu0 0.0
    %256 = vmatpush1.msra.mxu0 %v223
    %257 = vmatprep.subr.mxu0 0.0
    %258 = vmatpush1.msra.mxu0 %v222
    %259 = vmatprep.subr.mxu0 0.0
    %260 = vmatpush1.msra.mxu0 %v221
    %261 = vmatprep.subr.mxu0 0.0
    %262 = vmatpush1.msra.mxu0 %v220
    %263 = vmatprep.subr.mxu0 0.0
    %264 = vmatpush2.msra.mxu0 0.0
    %265 = vmatprep.subr.mxu0 0.0
    %266 = vmatpush2.msra.mxu0 0.0
    %267 = vmatprep.subr.mxu0 0.0
    %268 = vmatpush2.msra.mxu0 0.0
    %269 = vmatprep.subr.mxu0 0.0
    %270 = vmatpush2.msra.mxu0 0.0
    %271 = vmatprep.subr.mxu0 0.0
    %272 = vmatpush2.msra.mxu0 0.0
    %273 = vmatprep.subr.mxu0 0.0
    %274 = vmatpush2.msra.mxu0 0.0
    %275 = vmatprep.subr.mxu0 0.0
    %276 = vmatpush2.msra.mxu0 0.0
    %277 = vmatprep.subr.mxu0 0.0
    %278 = vmatpush2.msra.mxu0 0.0
    %279 = vmatprep.subr.mxu0 0.0
    %280 = vmatpush2.msra.mxu0 0.0
    %281 = vmatprep.subr.mxu0 0.0
    %282 = vmatpush2.msra.mxu0 0.0
    %283 = vmatprep.subr.mxu0 0.0
    %284 = vmatpush2.msra.mxu0 0.0
    %285 = vmatprep.subr.mxu0 0.0
    %286 = vmatpush2.msra.mxu0 0.0
    %287 = vmatprep.subr.mxu0 0.0
    %288 = vmatpush2.msra.mxu0 0.0
    %289 = vmatprep.subr.mxu0 0.0
    %290 = vmatpush2.msra.mxu0 0.0
    %291 = vmatprep.subr.mxu0 0.0
    %292 = vmatpush2.msra.mxu0 0.0
    %293 = vmatprep.subr.mxu0 0.0
    %294 = vmatpush2.msra.mxu0 0.0
    %295 = vmatprep.mubr.f32.mxu0 0.0
    %296 = vmatmul.mubr.f32.gmra.mxu0 %v66
    %v297 = vpop.f32.mrf.mxu0
    %v298 = vadd.f32 %v229, %v297
    %v299 = vpop.f32.mrf.mxu0
    %300 = vdwg.mxu0
    %v301 = vmax.f32 %v219, %v298
    %v302 = vld [vmem:[#allocation5 + $0x18] sm:$0xff]
    %v303 = vld [vmem:[#allocation5 + $0x38] sm:$0xff]
    %v304 = vld [vmem:[#allocation5 + $0x58] sm:$0xff]
    %v305 = vld [vmem:[#allocation5 + $0x78] sm:$0xff]
    %v306 = vld [vmem:[#allocation7 + $0x3] sm:$0x1]
    %v308 = vlaneseq
    %v309 = vshrl.u32 %v308, 7
    %v310 = vsub.s32 0, %v309
    %v311 = vrot.slane %v306, %v310
    %313 = vmatprep.subr.mxu0 0.0
    %314 = vmatpush1.msra.mxu0 0.0
    %315 = vmatprep.subr.mxu0 0.0
    %316 = vmatpush1.msra.mxu0 0.0
    %317 = vmatprep.subr.mxu0 0.0
    %318 = vmatpush1.msra.mxu0 0.0
    %319 = vmatprep.subr.mxu0 0.0
    %320 = vmatpush1.msra.mxu0 0.0
    %321 = vmatprep.subr.mxu0 0.0
    %322 = vmatpush1.msra.mxu0 0.0
    %323 = vmatprep.subr.mxu0 0.0
    %324 = vmatpush1.msra.mxu0 0.0
    %325 = vmatprep.subr.mxu0 0.0
    %326 = vmatpush1.msra.mxu0 0.0
    %327 = vmatprep.subr.mxu0 0.0
    %328 = vmatpush1.msra.mxu0 0.0
    %329 = vmatprep.subr.mxu0 0.0
    %330 = vmatpush1.msra.mxu0 0.0
    %331 = vmatprep.subr.mxu0 0.0
    %332 = vmatpush1.msra.mxu0 0.0
    %333 = vmatprep.subr.mxu0 0.0
    %334 = vmatpush1.msra.mxu0 0.0
    %335 = vmatprep.subr.mxu0 0.0
    %336 = vmatpush1.msra.mxu0 0.0
    %337 = vmatprep.subr.mxu0 0.0
    %338 = vmatpush1.msra.mxu0 %v305
    %339 = vmatprep.subr.mxu0 0.0
    %340 = vmatpush1.msra.mxu0 %v304
    %341 = vmatprep.subr.mxu0 0.0
    %342 = vmatpush1.msra.mxu0 %v303
    %343 = vmatprep.subr.mxu0 0.0
    %344 = vmatpush1.msra.mxu0 %v302
    %345 = vmatprep.subr.mxu0 0.0
    %346 = vmatpush2.msra.mxu0 0.0
    %347 = vmatprep.subr.mxu0 0.0
    %348 = vmatpush2.msra.mxu0 0.0
    %349 = vmatprep.subr.mxu0 0.0
    %350 = vmatpush2.msra.mxu0 0.0
    %351 = vmatprep.subr.mxu0 0.0
    %352 = vmatpush2.msra.mxu0 0.0
    %353 = vmatprep.subr.mxu0 0.0
    %354 = vmatpush2.msra.mxu0 0.0
    %355 = vmatprep.subr.mxu0 0.0
    %356 = vmatpush2.msra.mxu0 0.0
    %357 = vmatprep.subr.mxu0 0.0
    %358 = vmatpush2.msra.mxu0 0.0
    %359 = vmatprep.subr.mxu0 0.0
    %360 = vmatpush2.msra.mxu0 0.0
    %361 = vmatprep.subr.mxu0 0.0
    %362 = vmatpush2.msra.mxu0 0.0
    %363 = vmatprep.subr.mxu0 0.0
    %364 = vmatpush2.msra.mxu0 0.0
    %365 = vmatprep.subr.mxu0 0.0
    %366 = vmatpush2.msra.mxu0 0.0
    %367 = vmatprep.subr.mxu0 0.0
    %368 = vmatpush2.msra.mxu0 0.0
    %369 = vmatprep.subr.mxu0 0.0
    %370 = vmatpush2.msra.mxu0 0.0
    %371 = vmatprep.subr.mxu0 0.0
    %372 = vmatpush2.msra.mxu0 0.0
    %373 = vmatprep.subr.mxu0 0.0
    %374 = vmatpush2.msra.mxu0 0.0
    %375 = vmatprep.subr.mxu0 0.0
    %376 = vmatpush2.msra.mxu0 0.0
    %377 = vmatprep.mubr.f32.mxu0 0.0
    %378 = vmatmul.mubr.f32.gmra.mxu0 %v66
    %v379 = vpop.f32.mrf.mxu0
    %v380 = vadd.f32 %v311, %v379
    %v381 = vpop.f32.mrf.mxu0
    %382 = vdwg.mxu0
    %v383 = vmax.f32 %v301, %v380
    %384 = vst [vmem:[#allocation8] sm:$0xff] %v383
    // Predicated region
    $region26: #{tpu_custom_call.1} parent=1 // pred_check
      _
    $region27: #{tpu_custom_call.1} parent=1 // pred_check_branch
      %386 = sbr.rel (0) target = $region29
    $region28: #{tpu_custom_call.1} parent=1 // pred_region
      %s388 = ssub.s32 128, 128
      %389 = vsyncadd [#allocation4], %s388
      %s391 = sshll.u32 [#allocation8], 4
      %s392 = int_to_ptr.vmem [resolvable:$true] %s391
      %394 = dma.vmem_to_hbm [thread:$0]  %s392, 128, %s3, [#allocation4]
    $region29: #{tpu_custom_call.1} parent=1 // pred_fallthru
      _
    // Predicated region
    $region30: #{tpu_custom_call.1} parent=1 // pred_check
      _
    $region31: #{tpu_custom_call.1} parent=1 // pred_check_branch
      %396 = sbr.rel (0) target = $region33
    $region32: #{tpu_custom_call.1} parent=1 // pred_region
      %397 = dma.done [#allocation4], 128
    $region33: #{tpu_custom_call.1} parent=1 // pred_fallthru
      _
    %398 = vsyncpa [#allocation3], 1
    %399 = vsyncpa [#allocation6], 1
    %400 = vsyncpa [#allocation4], 1

</llo_original>
